<compile_context>
chip_gen: v7x
topology: tpu7x:2x2x1
jax: 0.10.0
libtpu: 0.0.40
codegen_flags: <defaults>
</compile_context>

<pallas_src>
import functools

import jax
import jax.numpy as jnp
from jax.experimental import pallas as pl
from jax.experimental.pallas import tpu as pltpu


# ----------------------------- Pallas kernel -------------------------------- #

def _propagate(a_mxu, d, y_f32, mxu_dtype):
    """d ⊙ ((A+I) @ (d ⊙ y)) without materializing A+I or A_norm."""
    z = d * y_f32                                              # [N, F] f32
    az = jnp.dot(a_mxu, z.astype(mxu_dtype),
                 preferred_element_type=jnp.float32)           # MXU, f32 accumulate
    return d * (az + z)                                        # "+ z" = self-loop (I @ z), f32


def _gcn_conv(a_mxu, d, x_f32, w_ref, b_ref, fout_real, mxu_dtype):
    """One GCNConv: A_norm @ (X W) + b.

    Contraction order is chosen statically against the REAL output width (not
    the lane-padded one); at these shapes every matmul is a single MXU pass
    either way, lane padding only affects the final store.
    """
    fin = x_f32.shape[-1]
    w = w_ref[...].astype(mxu_dtype)
    if fin <= fout_real:
        # propagate first: the N^2 matmul runs at the (narrower) input width
        p = _propagate(a_mxu, d, x_f32, mxu_dtype)
        out = jnp.dot(p.astype(mxu_dtype), w, preferred_element_type=jnp.float32)
    else:
        # transform first: the N^2 matmul runs at the (narrower) output width
        xw = jnp.dot(x_f32.astype(mxu_dtype), w, preferred_element_type=jnp.float32)
        out = _propagate(a_mxu, d, xw, mxu_dtype)
    return out + b_ref[...].astype(jnp.float32)


def _gcn_fused_kernel(a1_ref, a0_ref, x_ref, w1_ref, b1_ref, w2_ref, b2_ref,
                      o_ref, *, fout_real, mxu_dtype):
    """out = A0_norm @ (relu(A1_norm @ (X W1) + b1) W2) + b2, fully on-chip."""
    # ---- layer 1 -----------------------------------------------------------
    a1 = a1_ref[...]                                           # bf16 [N, N]
    # degree = rowsum(A) + 1 (self-loop); f32-accumulated sum of a bf16 A.
    d1 = jax.lax.rsqrt(
        jnp.sum(a1.astype(jnp.float32), axis=1, keepdims=True) + 1.0)   # [N, 1]
    a1 = a1.astype(mxu_dtype)                                  # single cast, MXU operand
    x = x_ref[...].astype(jnp.float32)
    h = jnp.maximum(
        _gcn_conv(a1, d1, x, w1_ref, b1_ref, w1_ref.shape[-1], mxu_dtype), 0.0)

    # ---- layer 2 (A0 has a short live range: loaded/cast right before use) --
    a0 = a0_ref[...]
    d0 = jax.lax.rsqrt(
        jnp.sum(a0.astype(jnp.float32), axis=1, keepdims=True) + 1.0)
    a0 = a0.astype(mxu_dtype)
    out = _gcn_conv(a0, d0, h, w2_ref, b2_ref, fout_real, mxu_dtype)
    o_ref[...] = out.astype(o_ref.dtype)


# ------------------------------ JAX wrapper ---------------------------------- #

def prepare_params(params, *, lane=128):
    """One-time parameter preparation (do NOT redo this per forward call):
    reshape b1 to [1, H] and lane-pad W2/b2 to a multiple of 128 so the kernel's
    final store is lane-dense (unmasked vst)."""
    w1, b1, w2, b2 = (jnp.asarray(p, jnp.float32) for p in params)
    hidden = w1.shape[1]
    fout = w2.shape[1]
    fout_pad = ((fout + lane - 1) // lane) * lane
    w2p = jnp.zeros((hidden, fout_pad), jnp.float32).at[:, :fout].set(w2)
    b2p = jnp.zeros((1, fout_pad), jnp.float32).at[0, :fout].set(b2)
    b1r = b1.reshape(1, hidden)
    return {"w1": w1, "b1": b1r, "w2": w2p, "b2": b2p,
            "fout": fout, "fout_pad": fout_pad}


def gcn_forward_batched(prep, x, adj1, adj0, *, mxu_dtype=jnp.bfloat16,
                        return_padded=False):
    """Batched forward over B independent graphs.

    x:    [B, N, Fin] float32 node features.
    adj1: [B, N, N]   0/1 SYMMETRIC adjacency used by conv1 (== adjs[1]).
    adj0: [B, N, N]   0/1 SYMMETRIC adjacency used by conv2 (== adjs[0]).
    Returns [B, N, out_dim] (or the lane-padded slab if return_padded=True).
    """
    B, n, fin = x.shape
    hidden = prep["w1"].shape[1]
    fout, fout_pad = prep["fout"], prep["fout_pad"]

    # Adjacency in bf16: 0/1 is exact, halves HBM->VMEM DMA and VMEM footprint.
    adj1 = adj1.astype(jnp.bfloat16)
    adj0 = adj0.astype(jnp.bfloat16)
    x = x.astype(jnp.float32)

    kernel = functools.partial(_gcn_fused_kernel, fout_real=fout,
                               mxu_dtype=mxu_dtype)
    out_pad = pl.pallas_call(
        kernel,
        out_shape=jax.ShapeDtypeStruct((B, n, fout_pad), jnp.float32),
        grid=(B,),
        in_specs=[
            pl.BlockSpec((pl.Squeezed(), n, n), lambda b: (b, 0, 0)),      # A conv1
            pl.BlockSpec((pl.Squeezed(), n, n), lambda b: (b, 0, 0)),      # A conv2
            pl.BlockSpec((pl.Squeezed(), n, fin), lambda b: (b, 0, 0)),    # X
            pl.BlockSpec((fin, hidden), lambda b: (0, 0)),                 # W1 (shared)
            pl.BlockSpec((1, hidden), lambda b: (0, 0)),                   # b1
            pl.BlockSpec((hidden, fout_pad), lambda b: (0, 0)),            # W2 (padded)
            pl.BlockSpec((1, fout_pad), lambda b: (0, 0)),                 # b2 (padded)
        ],
        out_specs=pl.BlockSpec((pl.Squeezed(), n, fout_pad), lambda b: (b, 0, 0)),
        compiler_params=pltpu.CompilerParams(
            dimension_semantics=("parallel",)),                # v7x: batch across TCs
    )(adj1, adj0, x, prep["w1"], prep["b1"], prep["w2"], prep["b2"])

    if return_padded:
        return out_pad
    return out_pad[..., :fout]


def gcn_forward(prep, x, adjs, *, mxu_dtype=jnp.bfloat16, return_padded=False):
    """Matches GCN.forward: dropout (eval no-op) -> relu(conv1(x, adjs[1]))
    -> dropout -> conv2(., adjs[0]).  Single graph; adjs must be symmetric."""
    out = gcn_forward_batched(prep, x[None], adjs[1][None], adjs[0][None],
                              mxu_dtype=mxu_dtype, return_padded=return_padded)
    return out[0]


# --------------------------------- main --------------------------------------- #

if __name__ == "__main__":
    N = 128          # number of nodes per graph
    IN_DIM = 32
    HIDDEN = 64
    OUT_DIM = 16
    B = 4            # batch of sampled graphs for the parallel-grid path

    key = jax.random.PRNGKey(0)
    kx, ka1, ka0, kw1, kw2 = jax.random.split(key, 5)

    # batched node features and random symmetric 0/1 adjacencies (no self-loops)
    x_b = jax.random.normal(kx, (B, N, IN_DIM), dtype=jnp.float32)

    def make_adj(k, b):
        a = (jax.random.uniform(k, (b, N, N)) < 0.08).astype(jnp.float32)
        a = jnp.maximum(a, jnp.swapaxes(a, -1, -2))            # symmetric / undirected
        a = a * (1.0 - jnp.eye(N, dtype=jnp.float32))          # self-loops added in kernel
        return a

    adj1_b = make_adj(ka1, B)   # used by conv1  (adjs[1])
    adj0_b = make_adj(ka0, B)   # used by conv2  (adjs[0])

    # deterministic Glorot-style init (GCNConv: weight [in, out], bias [out])
    def glorot(k, fan_in, fan_out):
        lim = jnp.sqrt(6.0 / (fan_in + fan_out))
        return jax.random.uniform(k, (fan_in, fan_out), jnp.float32, -lim, lim)

    w1 = glorot(kw1, IN_DIM, HIDDEN)
    b1 = jnp.zeros((HIDDEN,), jnp.float32)
    w2 = glorot(kw2, HIDDEN, OUT_DIM)
    b2 = jnp.zeros((OUT_DIM,), jnp.float32)

    prep = prepare_params((w1, b1, w2, b2))     # one-time padding / reshape

    # --- batched run (grid=(B,), "parallel") ---------------------------------
    out_b = gcn_forward_batched(prep, x_b, adj1_b, adj0_b)
    out_b = jax.block_until_ready(out_b)
    assert out_b.shape == (B, N, OUT_DIM) and out_b.dtype == jnp.float32

    # --- single-graph run matching GCN.forward(x, adjs) ----------------------
    out_s = gcn_forward(prep, x_b[0], [adj0_b[0], adj1_b[0]])
    out_s = jax.block_until_ready(out_s)
    assert out_s.shape == (N, OUT_DIM) and out_s.dtype == jnp.float32

    # pure-JAX f32 reference (PyG-style GCNConv) — loose tolerance for bf16 MXU inputs
    def ref_conv(a, h, w, b):
        a_hat = a + jnp.eye(a.shape[0], dtype=jnp.float32)
        d = jax.lax.rsqrt(jnp.sum(a_hat, axis=1))
        a_norm = d[:, None] * a_hat * d[None, :]
        return a_norm @ (h @ w) + b

    def ref_fwd(x, a1, a0):
        return ref_conv(a0, jnp.maximum(ref_conv(a1, x, w1, b1), 0.0), w2, b2)

    ref_b = jax.vmap(ref_fwd)(x_b, adj1_b, adj0_b)
    err_b = float(jnp.max(jnp.abs(out_b - ref_b)))
    err_s = float(jnp.max(jnp.abs(out_s - ref_b[0])))
    assert err_b < 0.1, f"batched max abs error {err_b}"
    assert err_s < 0.1, f"single-graph max abs error {err_s}"

    print("KERNEL_OK")
</pallas_src>

<mosaic_0001>
module attributes {stable_mosaic.version = 11 : i64} {
  func.func @_gcn_fused_kernel(%arg0: i32, %arg1: memref<1x128x128xbf16, #tpu.memory_space<vmem>>, %arg2: memref<1x128x128xbf16, #tpu.memory_space<vmem>>, %arg3: memref<1x128x32xf32, #tpu.memory_space<vmem>>, %arg4: memref<32x64xf32, #tpu.memory_space<vmem>>, %arg5: memref<1x64xf32, #tpu.memory_space<vmem>>, %arg6: memref<64x128xf32, #tpu.memory_space<vmem>>, %arg7: memref<1x128xf32, #tpu.memory_space<vmem>>, %arg8: memref<1x128x128xf32, #tpu.memory_space<vmem>>) attributes {dimension_semantics = [#tpu.dimension_semantics<parallel>], iteration_bounds = array<i64: 4>, scalar_prefetch = 0 : i64, scratch_operands = 0 : i64, tpu.core_type = #tpu.core_type<tc>, window_params = [{transform_indices = @transform_0, window_bounds = array<i64: 1, 128, 128>}, {transform_indices = @transform_1, window_bounds = array<i64: 1, 128, 128>}, {transform_indices = @transform_2, window_bounds = array<i64: 1, 128, 32>}, {pipeline_mode = #tpu.pipeline_mode<synchronous>, transform_indices = @transform_3, window_bounds = array<i64: 32, 64>}, {pipeline_mode = #tpu.pipeline_mode<synchronous>, transform_indices = @transform_4, window_bounds = array<i64: 1, 64>}, {pipeline_mode = #tpu.pipeline_mode<synchronous>, transform_indices = @transform_5, window_bounds = array<i64: 64, 128>}, {pipeline_mode = #tpu.pipeline_mode<synchronous>, transform_indices = @transform_6, window_bounds = array<i64: 1, 128>}, {transform_indices = @transform_7, window_bounds = array<i64: 1, 128, 128>}]} {
    %c0 = arith.constant 0 : index
    %c0_0 = arith.constant 0 : index
    %c0_1 = arith.constant 0 : index
    %0 = vector.load %arg1[%c0, %c0_0, %c0_1] : memref<1x128x128xbf16, #tpu.memory_space<vmem>>, vector<1x128x128xbf16>
    %1 = vector.shape_cast %0 : vector<1x128x128xbf16> to vector<128x128xbf16>
    %2 = arith.extf %1 : vector<128x128xbf16> to vector<128x128xf32>
    %cst = arith.constant dense<0.000000e+00> : vector<128xf32>
    %3 = vector.multi_reduction <add>, %2, %cst [1] : vector<128x128xf32> to vector<128xf32>
    %4 = vector.shape_cast %3 : vector<128xf32> to vector<128x1xf32>
    %cst_2 = arith.constant 1.000000e+00 : f32
    %5 = vector.broadcast %cst_2 : f32 to vector<128x1xf32>
    %6 = arith.addf %4, %5 : vector<128x1xf32>
    %7 = math.rsqrt %6 : vector<128x1xf32>
    %c0_3 = arith.constant 0 : index
    %c0_4 = arith.constant 0 : index
    %c0_5 = arith.constant 0 : index
    %8 = vector.load %arg3[%c0_3, %c0_4, %c0_5] : memref<1x128x32xf32, #tpu.memory_space<vmem>>, vector<1x128x32xf32>
    %9 = vector.shape_cast %8 : vector<1x128x32xf32> to vector<128x32xf32>
    %c0_6 = arith.constant 0 : index
    %c0_7 = arith.constant 0 : index
    %10 = vector.load %arg4[%c0_6, %c0_7] : memref<32x64xf32, #tpu.memory_space<vmem>>, vector<32x64xf32>
    %11 = arith.truncf %10 : vector<32x64xf32> to vector<32x64xbf16>
    %12 = vector.broadcast %7 : vector<128x1xf32> to vector<128x32xf32>
    %13 = arith.mulf %12, %9 : vector<128x32xf32>
    %14 = arith.truncf %13 : vector<128x32xf32> to vector<128x32xbf16>
    %cst_8 = arith.constant dense<0.000000e+00> : vector<128x32xf32>
    %15 = tpu.matmul %1, %14, %cst_8 {dimension_numbers = #tpu.dot_dimension_numbers<[1], [0], [0], [1], [0, 0, 1, 1], [], []>} : vector<128x128xbf16>, vector<128x32xbf16>, vector<128x32xf32> -> vector<128x32xf32>
    %16 = arith.addf %15, %13 : vector<128x32xf32>
    %17 = vector.broadcast %7 : vector<128x1xf32> to vector<128x32xf32>
    %18 = arith.mulf %17, %16 : vector<128x32xf32>
    %19 = arith.truncf %18 : vector<128x32xf32> to vector<128x32xbf16>
    %cst_9 = arith.constant dense<0.000000e+00> : vector<128x64xf32>
    %20 = tpu.matmul %19, %11, %cst_9 {dimension_numbers = #tpu.dot_dimension_numbers<[1], [0], [0], [1], [0, 0, 1, 1], [], []>} : vector<128x32xbf16>, vector<32x64xbf16>, vector<128x64xf32> -> vector<128x64xf32>
    %c0_10 = arith.constant 0 : index
    %c0_11 = arith.constant 0 : index
    %21 = vector.load %arg5[%c0_10, %c0_11] : memref<1x64xf32, #tpu.memory_space<vmem>>, vector<1x64xf32>
    %22 = vector.broadcast %21 : vector<1x64xf32> to vector<128x64xf32>
    %23 = arith.addf %20, %22 : vector<128x64xf32>
    %cst_12 = arith.constant 0.000000e+00 : f32
    %24 = vector.broadcast %cst_12 : f32 to vector<128x64xf32>
    %25 = arith.maximumf %23, %24 : vector<128x64xf32>
    %c0_13 = arith.constant 0 : index
    %c0_14 = arith.constant 0 : index
    %c0_15 = arith.constant 0 : index
    %26 = vector.load %arg2[%c0_13, %c0_14, %c0_15] : memref<1x128x128xbf16, #tpu.memory_space<vmem>>, vector<1x128x128xbf16>
    %27 = vector.shape_cast %26 : vector<1x128x128xbf16> to vector<128x128xbf16>
    %28 = arith.extf %27 : vector<128x128xbf16> to vector<128x128xf32>
    %cst_16 = arith.constant dense<0.000000e+00> : vector<128xf32>
    %29 = vector.multi_reduction <add>, %28, %cst_16 [1] : vector<128x128xf32> to vector<128xf32>
    %30 = vector.shape_cast %29 : vector<128xf32> to vector<128x1xf32>
    %cst_17 = arith.constant 1.000000e+00 : f32
    %31 = vector.broadcast %cst_17 : f32 to vector<128x1xf32>
    %32 = arith.addf %30, %31 : vector<128x1xf32>
    %33 = math.rsqrt %32 : vector<128x1xf32>
    %c0_18 = arith.constant 0 : index
    %c0_19 = arith.constant 0 : index
    %34 = vector.load %arg6[%c0_18, %c0_19] : memref<64x128xf32, #tpu.memory_space<vmem>>, vector<64x128xf32>
    %35 = arith.truncf %34 : vector<64x128xf32> to vector<64x128xbf16>
    %36 = arith.truncf %25 : vector<128x64xf32> to vector<128x64xbf16>
    %cst_20 = arith.constant dense<0.000000e+00> : vector<128x128xf32>
    %37 = tpu.matmul %36, %35, %cst_20 {dimension_numbers = #tpu.dot_dimension_numbers<[1], [0], [0], [1], [0, 0, 1, 1], [], []>} : vector<128x64xbf16>, vector<64x128xbf16>, vector<128x128xf32> -> vector<128x128xf32>
    %38 = vector.broadcast %33 : vector<128x1xf32> to vector<128x128xf32>
    %39 = arith.mulf %38, %37 : vector<128x128xf32>
    %40 = arith.truncf %39 : vector<128x128xf32> to vector<128x128xbf16>
    %cst_21 = arith.constant dense<0.000000e+00> : vector<128x128xf32>
    %41 = tpu.matmul %27, %40, %cst_21 {dimension_numbers = #tpu.dot_dimension_numbers<[1], [0], [0], [1], [0, 0, 1, 1], [], []>} : vector<128x128xbf16>, vector<128x128xbf16>, vector<128x128xf32> -> vector<128x128xf32>
    %42 = arith.addf %41, %39 : vector<128x128xf32>
    %43 = vector.broadcast %33 : vector<128x1xf32> to vector<128x128xf32>
    %44 = arith.mulf %43, %42 : vector<128x128xf32>
    %c0_22 = arith.constant 0 : index
    %c0_23 = arith.constant 0 : index
    %45 = vector.load %arg7[%c0_22, %c0_23] : memref<1x128xf32, #tpu.memory_space<vmem>>, vector<1x128xf32>
    %46 = vector.broadcast %45 : vector<1x128xf32> to vector<128x128xf32>
    %47 = arith.addf %44, %46 : vector<128x128xf32>
    %c0_24 = arith.constant 0 : index
    %c0_25 = arith.constant 0 : index
    %c0_26 = arith.constant 0 : index
    %48 = vector.load %arg8[%c0_24, %c0_25, %c0_26] : memref<1x128x128xf32, #tpu.memory_space<vmem>>, vector<1x128x128xf32>
    %49 = vector.shape_cast %48 : vector<1x128x128xf32> to vector<128x128xf32>
    %50 = vector.shape_cast %47 : vector<128x128xf32> to vector<1x128x128xf32>
    tpu.vector_store %arg8[%c0_24, %c0_25, %c0_26], %50 {strides = array<i32>} : memref<1x128x128xf32, #tpu.memory_space<vmem>>, vector<1x128x128xf32>,
    return
  }
  func.func @transform_0(%arg0: i32) -> (i32, i32, i32) {
    %c0_i32 = arith.constant 0 : i32
    %c0_i32_0 = arith.constant 0 : i32
    %c0_i32_1 = arith.constant 0 : i32
    return %arg0, %c0_i32, %c0_i32_0 : i32, i32, i32
  }
  func.func @transform_1(%arg0: i32) -> (i32, i32, i32) {
    %c0_i32 = arith.constant 0 : i32
    %c0_i32_0 = arith.constant 0 : i32
    %c0_i32_1 = arith.constant 0 : i32
    return %arg0, %c0_i32, %c0_i32_0 : i32, i32, i32
  }
  func.func @transform_2(%arg0: i32) -> (i32, i32, i32) {
    %c0_i32 = arith.constant 0 : i32
    %c0_i32_0 = arith.constant 0 : i32
    %c0_i32_1 = arith.constant 0 : i32
    return %arg0, %c0_i32, %c0_i32_0 : i32, i32, i32
  }
  func.func @transform_3(%arg0: i32) -> (i32, i32) {
    %c0_i32 = arith.constant 0 : i32
    %c0_i32_0 = arith.constant 0 : i32
    %c0_i32_1 = arith.constant 0 : i32
    return %c0_i32, %c0_i32_0 : i32, i32
  }
  func.func @transform_4(%arg0: i32) -> (i32, i32) {
    %c0_i32 = arith.constant 0 : i32
    %c0_i32_0 = arith.constant 0 : i32
    %c0_i32_1 = arith.constant 0 : i32
    return %c0_i32, %c0_i32_0 : i32, i32
  }
  func.func @transform_5(%arg0: i32) -> (i32, i32) {
    %c0_i32 = arith.constant 0 : i32
    %c0_i32_0 = arith.constant 0 : i32
    %c0_i32_1 = arith.constant 0 : i32
    return %c0_i32, %c0_i32_0 : i32, i32
  }
  func.func @transform_6(%arg0: i32) -> (i32, i32) {
    %c0_i32 = arith.constant 0 : i32
    %c0_i32_0 = arith.constant 0 : i32
    %c0_i32_1 = arith.constant 0 : i32
    return %c0_i32, %c0_i32_0 : i32, i32
  }
  func.func @transform_7(%arg0: i32) -> (i32, i32, i32) {
    %c0_i32 = arith.constant 0 : i32
    %c0_i32_0 = arith.constant 0 : i32
    %c0_i32_1 = arith.constant 0 : i32
    return %arg0, %c0_i32, %c0_i32_0 : i32, i32, i32
  }
}

</mosaic_0001>

<llo_original>
// kernel: tpu_custom_call.1
$region0: #{tpu_custom_call.1}
  #allocation0 [shape = 'u32[]', space=smem, size = 0x4, offset = 0x4, fixed_abs, tag = 'smem constant byte address 0x4 - core index']
  #allocation1 [shape = 'u32[144,128]{1,0:T(1,128)}', space=vmem, size = 0x12000, scoped, tag = 'internal scratch']
  %s0 = inlined_call_operand.vmem [shape: bf16[4,128,128], index: 0, kind: input, shape index: {}]
  %s1 = inlined_call_operand.vmem [shape: bf16[4,128,128], index: 1, kind: input, shape index: {}]
  %s2 = inlined_call_operand.vmem [shape: f32[4,128,32], index: 2, kind: input, shape index: {}]
  %s3 = inlined_call_operand.vmem [shape: f32[32,64], index: 3, kind: input, shape index: {}]
  %s4 = inlined_call_operand.vmem [shape: f32[1,64], index: 4, kind: input, shape index: {}]
  %s5 = inlined_call_operand.vmem [shape: f32[64,128], index: 5, kind: input, shape index: {}]
  %s6 = inlined_call_operand.vmem [shape: f32[1,128], index: 6, kind: input, shape index: {}]
  %s7 = inlined_call_operand.hbm [shape: f32[4,128,128], index: 7, kind: output, shape index: {}]
  %s8 = sld [smem:[#allocation0]]
  $region61: #{tpu_custom_call.1} parent=0
    _
  %s10 = ssub.s32 1, %s8
  %s11 = scalar_select 0, %s10, %s8
  $region1: #{tpu_custom_call.1} parent=0
    #allocation2 [shape = 'u8[131072]{0}', space=vmem, size = 0x20000, scoped, tag = 'output window, operand 0']
    #allocation3 [shape = 's32[2]{0}', space=sflag, size = 0x8, scoped, tag = 'scoped memory for tpu_custom_call.1']
    %12 = vsyncpa [#allocation3], 0
    %s13 = scalar_lea.sflag [#allocation3], 1
    %14 = vsyncpa %s13, 0
    loop: start=0, step=1, limit=6
    $region2: #{tpu_custom_call.1} parent=1 // loop_pre_header
      _
    $region3: #{tpu_custom_call.1} parent=1 // loop_header
      %s16 = sphi 0, %s20
      %p17 = scmp.ge.s32.totalorder %s16, 6
      %s26 = sphi 0, %s28
      %s29 = sphi 0, %s26
      %s30 = sphi 0, %s29
      %s46 = sphi 0, %s30
      %s52 = sphi 0, %s54
      %s55 = sphi 0, %s52
      %s56 = sphi 0, %s55
      %s72 = sphi 0, %s56
      %s78 = sphi 0, %s80
      %s81 = sphi 0, %s78
      %s82 = sphi 0, %s81
      %s98 = sphi 0, %s82
      %s102 = sphi 0, %s102
      %s104 = sphi 0, %s102
      %s105 = sphi 0, %s104
      %s119 = sphi 0, %s105
      %s123 = sphi 0, %s123
      %s125 = sphi 0, %s123
      %s126 = sphi 0, %s125
      %s140 = sphi 0, %s126
      %s144 = sphi 0, %s144
      %s146 = sphi 0, %s144
      %s147 = sphi 0, %s146
      %s161 = sphi 0, %s147
      %s165 = sphi 0, %s165
      %s167 = sphi 0, %s165
      %s168 = sphi 0, %s167
      %s182 = sphi 0, %s168
      %s188 = sphi 0, %s190
      %s191 = sphi 0, %s188
      %s192 = sphi 0, %s191
      %s208 = sphi 0, %s192
    $region4: #{tpu_custom_call.1} parent=1 // loop_header_branch
      %19 = sbr.rel (%p17) target = $region8
    $region5: #{tpu_custom_call.1} parent=1 // loop_body
      %s21 = ssub.s32 %s16, 1
      %s22 = ssub.s32 %s16, 2
      %s23 = sadd.s32 %s16, 1
      %s24 = ssub.s32 %s16, %s23
      %p25 = scmp.eq.s32.totalorder %s24, 0
      %s27 = sadd.s32 %s26, 1
      %s28 = scalar_select %p25, %s26, %s27
      %p31 = pneg %p25
      %p32 = scmp.eq.s32.totalorder %s16, 3
      %p33 = por %p31, %p32
      %p34 = scmp.ne.s32.totalorder %s26, %s29
      %p35 = scmp.eq.s32.totalorder %s16, 0
      %p36 = por %p34, %p35
      %p37 = scmp.ne.s32.totalorder %s26, %s29
      %p38 = scmp.eq.s32.totalorder %s21, 3
      %p39 = por %p37, %p38
      %p40 = scmp.ne.s32.totalorder %s29, %s30
      %p41 = scmp.eq.s32.totalorder %s21, 0
      %p42 = por %p40, %p41
      %p43 = scmp.ne.s32.totalorder %s29, %s30
      %p44 = scmp.eq.s32.totalorder %s22, 3
      %p45 = por %p43, %p44
      %p47 = scmp.ne.s32.totalorder %s30, %s46
      %p48 = scmp.eq.s32.totalorder %s22, 0
      %p49 = por %p47, %p48
      %s50 = ssub.s32 %s16, %s23
      %p51 = scmp.eq.s32.totalorder %s50, 0
      %s53 = sadd.s32 %s52, 1
      %s54 = scalar_select %p51, %s52, %s53
      %p57 = pneg %p51
      %p58 = scmp.eq.s32.totalorder %s16, 3
      %p59 = por %p57, %p58
      %p60 = scmp.ne.s32.totalorder %s52, %s55
      %p61 = scmp.eq.s32.totalorder %s16, 0
      %p62 = por %p60, %p61
      %p63 = scmp.ne.s32.totalorder %s52, %s55
      %p64 = scmp.eq.s32.totalorder %s21, 3
      %p65 = por %p63, %p64
      %p66 = scmp.ne.s32.totalorder %s55, %s56
      %p67 = scmp.eq.s32.totalorder %s21, 0
      %p68 = por %p66, %p67
      %p69 = scmp.ne.s32.totalorder %s55, %s56
      %p70 = scmp.eq.s32.totalorder %s22, 3
      %p71 = por %p69, %p70
      %p73 = scmp.ne.s32.totalorder %s56, %s72
      %p74 = scmp.eq.s32.totalorder %s22, 0
      %p75 = por %p73, %p74
      %s76 = ssub.s32 %s16, %s23
      %p77 = scmp.eq.s32.totalorder %s76, 0
      %s79 = sadd.s32 %s78, 1
      %s80 = scalar_select %p77, %s78, %s79
      %p83 = pneg %p77
      %p84 = scmp.eq.s32.totalorder %s16, 3
      %p85 = por %p83, %p84
      %p86 = scmp.ne.s32.totalorder %s78, %s81
      %p87 = scmp.eq.s32.totalorder %s16, 0
      %p88 = por %p86, %p87
      %p89 = scmp.ne.s32.totalorder %s78, %s81
      %p90 = scmp.eq.s32.totalorder %s21, 3
      %p91 = por %p89, %p90
      %p92 = scmp.ne.s32.totalorder %s81, %s82
      %p93 = scmp.eq.s32.totalorder %s21, 0
      %p94 = por %p92, %p93
      %p95 = scmp.ne.s32.totalorder %s81, %s82
      %p96 = scmp.eq.s32.totalorder %s22, 3
      %p97 = por %p95, %p96
      %p99 = scmp.ne.s32.totalorder %s82, %s98
      %p100 = scmp.eq.s32.totalorder %s22, 0
      %p101 = por %p99, %p100
      %s103 = sadd.s32 %s102, 1
      %p106 = scmp.eq.s32.totalorder %s16, 3
      %p107 = scmp.ne.s32.totalorder %s102, %s104
      %p108 = scmp.eq.s32.totalorder %s16, 0
      %p109 = por %p107, %p108
      %p110 = scmp.ne.s32.totalorder %s102, %s104
      %p111 = scmp.eq.s32.totalorder %s21, 3
      %p112 = por %p110, %p111
      %p113 = scmp.ne.s32.totalorder %s104, %s105
      %p114 = scmp.eq.s32.totalorder %s21, 0
      %p115 = por %p113, %p114
      %p116 = scmp.ne.s32.totalorder %s104, %s105
      %p117 = scmp.eq.s32.totalorder %s22, 3
      %p118 = por %p116, %p117
      %p120 = scmp.ne.s32.totalorder %s105, %s119
      %p121 = scmp.eq.s32.totalorder %s22, 0
      %p122 = por %p120, %p121
      %s124 = sadd.s32 %s123, 1
      %p127 = scmp.eq.s32.totalorder %s16, 3
      %p128 = scmp.ne.s32.totalorder %s123, %s125
      %p129 = scmp.eq.s32.totalorder %s16, 0
      %p130 = por %p128, %p129
      %p131 = scmp.ne.s32.totalorder %s123, %s125
      %p132 = scmp.eq.s32.totalorder %s21, 3
      %p133 = por %p131, %p132
      %p134 = scmp.ne.s32.totalorder %s125, %s126
      %p135 = scmp.eq.s32.totalorder %s21, 0
      %p136 = por %p134, %p135
      %p137 = scmp.ne.s32.totalorder %s125, %s126
      %p138 = scmp.eq.s32.totalorder %s22, 3
      %p139 = por %p137, %p138
      %p141 = scmp.ne.s32.totalorder %s126, %s140
      %p142 = scmp.eq.s32.totalorder %s22, 0
      %p143 = por %p141, %p142
      %s145 = sadd.s32 %s144, 1
      %p148 = scmp.eq.s32.totalorder %s16, 3
      %p149 = scmp.ne.s32.totalorder %s144, %s146
      %p150 = scmp.eq.s32.totalorder %s16, 0
      %p151 = por %p149, %p150
      %p152 = scmp.ne.s32.totalorder %s144, %s146
      %p153 = scmp.eq.s32.totalorder %s21, 3
      %p154 = por %p152, %p153
      %p155 = scmp.ne.s32.totalorder %s146, %s147
      %p156 = scmp.eq.s32.totalorder %s21, 0
      %p157 = por %p155, %p156
      %p158 = scmp.ne.s32.totalorder %s146, %s147
      %p159 = scmp.eq.s32.totalorder %s22, 3
      %p160 = por %p158, %p159
      %p162 = scmp.ne.s32.totalorder %s147, %s161
      %p163 = scmp.eq.s32.totalorder %s22, 0
      %p164 = por %p162, %p163
      %s166 = sadd.s32 %s165, 1
      %p169 = scmp.eq.s32.totalorder %s16, 3
      %p170 = scmp.ne.s32.totalorder %s165, %s167
      %p171 = scmp.eq.s32.totalorder %s16, 0
      %p172 = por %p170, %p171
      %p173 = scmp.ne.s32.totalorder %s165, %s167
      %p174 = scmp.eq.s32.totalorder %s21, 3
      %p175 = por %p173, %p174
      %p176 = scmp.ne.s32.totalorder %s167, %s168
      %p177 = scmp.eq.s32.totalorder %s21, 0
      %p178 = por %p176, %p177
      %p179 = scmp.ne.s32.totalorder %s167, %s168
      %p180 = scmp.eq.s32.totalorder %s22, 3
      %p181 = por %p179, %p180
      %p183 = scmp.ne.s32.totalorder %s168, %s182
      %p184 = scmp.eq.s32.totalorder %s22, 0
      %p185 = por %p183, %p184
      %s186 = ssub.s32 %s16, %s23
      %p187 = scmp.eq.s32.totalorder %s186, 0
      %s189 = sadd.s32 %s188, 1
      %s190 = scalar_select %p187, %s188, %s189
      %p193 = pneg %p187
      %p194 = scmp.eq.s32.totalorder %s16, 3
      %p195 = por %p193, %p194
      %p196 = scmp.ne.s32.totalorder %s188, %s191
      %p197 = scmp.eq.s32.totalorder %s16, 0
      %p198 = por %p196, %p197
      %p199 = scmp.ne.s32.totalorder %s188, %s191
      %p200 = scmp.eq.s32.totalorder %s21, 3
      %p201 = por %p199, %p200
      %p202 = scmp.ne.s32.totalorder %s191, %s192
      %p203 = scmp.eq.s32.totalorder %s21, 0
      %p204 = por %p202, %p203
      %p205 = scmp.ne.s32.totalorder %s191, %s192
      %p206 = scmp.eq.s32.totalorder %s22, 3
      %p207 = por %p205, %p206
      %p209 = scmp.ne.s32.totalorder %s192, %s208
      %p210 = scmp.eq.s32.totalorder %s22, 0
      %p211 = por %p209, %p210
      %p212 = scmp.le.s32.totalorder 1, %s16
      %p213 = scmp.lt.s32.totalorder %s16, 5
      %p214 = pnand %p212, %p213
      %p215 = pneg %p214
      // Predicated region
      $region9: #{tpu_custom_call.1} parent=5 // pred_check
        _
      $region10: #{tpu_custom_call.1} parent=5 // pred_check_branch
        %217 = sbr.rel (%p214) target = $region12
      $region11: #{tpu_custom_call.1} parent=5 // pred_region
        %s218 = ssub.s32 %s16, 1
        // Predicated region
        $region13: #{tpu_custom_call.1} parent=11 // pred_check
          %p219 = pneg %p115
        $region14: #{tpu_custom_call.1} parent=11 // pred_check_branch
          %221 = sbr.rel (%p219) target = $region16
        $region15: #{tpu_custom_call.1} parent=11 // pred_region
          _
        $region16: #{tpu_custom_call.1} parent=11 // pred_fallthru
          _
        // Predicated region
        $region17: #{tpu_custom_call.1} parent=11 // pred_check
          %p222 = pneg %p136
        $region18: #{tpu_custom_call.1} parent=11 // pred_check_branch
          %224 = sbr.rel (%p222) target = $region20
        $region19: #{tpu_custom_call.1} parent=11 // pred_region
          _
        $region20: #{tpu_custom_call.1} parent=11 // pred_fallthru
          _
        // Predicated region
        $region21: #{tpu_custom_call.1} parent=11 // pred_check
          %p225 = pneg %p157
        $region22: #{tpu_custom_call.1} parent=11 // pred_check_branch
          %227 = sbr.rel (%p225) target = $region24
        $region23: #{tpu_custom_call.1} parent=11 // pred_region
          _
        $region24: #{tpu_custom_call.1} parent=11 // pred_fallthru
          _
        // Predicated region
        $region25: #{tpu_custom_call.1} parent=11 // pred_check
          %p228 = pneg %p178
        $region26: #{tpu_custom_call.1} parent=11 // pred_check_branch
          %230 = sbr.rel (%p228) target = $region28
        $region27: #{tpu_custom_call.1} parent=11 // pred_region
          _
        $region28: #{tpu_custom_call.1} parent=11 // pred_fallthru
          _
      $region12: #{tpu_custom_call.1} parent=5 // pred_fallthru
        _
      %p231 = scmp.lt.s32.totalorder %s16, 4
      // Predicated region
      $region29: #{tpu_custom_call.1} parent=5 // pred_check
        %p232 = pneg %p231
      $region30: #{tpu_custom_call.1} parent=5 // pred_check_branch
        %234 = sbr.rel (%p232) target = $region32
      $region31: #{tpu_custom_call.1} parent=5 // pred_region
        // Predicated region
        $region33: #{tpu_custom_call.1} parent=31 // pred_check
          %p235 = pneg %p36
        $region34: #{tpu_custom_call.1} parent=31 // pred_check_branch
          %237 = sbr.rel (%p235) target = $region36
        $region35: #{tpu_custom_call.1} parent=31 // pred_region
          %p238 = scmp.lt.s32.totalorder %s16, 3
          %s239 = scalar_select %p238, %s16, 3
          %s240 = smul.addr %s239, 16
          %s241 = smul.addr %s240, 4
          %s242 = scalar_lea.vmem %s0, %s241
        $region36: #{tpu_custom_call.1} parent=31 // pred_fallthru
          _
        // Predicated region
        $region37: #{tpu_custom_call.1} parent=31 // pred_check
          %p243 = pneg %p62
        $region38: #{tpu_custom_call.1} parent=31 // pred_check_branch
          %245 = sbr.rel (%p243) target = $region40
        $region39: #{tpu_custom_call.1} parent=31 // pred_region
          %p246 = scmp.lt.s32.totalorder %s16, 3
          %s247 = scalar_select %p246, %s16, 3
          %s248 = smul.addr %s247, 16
          %s249 = smul.addr %s248, 4
          %s250 = scalar_lea.vmem %s1, %s249
        $region40: #{tpu_custom_call.1} parent=31 // pred_fallthru
          _
        // Predicated region
        $region41: #{tpu_custom_call.1} parent=31 // pred_check
          %p251 = pneg %p88
        $region42: #{tpu_custom_call.1} parent=31 // pred_check_branch
          %253 = sbr.rel (%p251) target = $region44
        $region43: #{tpu_custom_call.1} parent=31 // pred_region
          %p254 = scmp.lt.s32.totalorder %s16, 3
          %s255 = scalar_select %p254, %s16, 3
          %s256 = smul.addr %s255, 16
          %s257 = smul.addr %s256, 8
          %s258 = scalar_lea.vmem %s2, %s257
        $region44: #{tpu_custom_call.1} parent=31 // pred_fallthru
          _
      $region32: #{tpu_custom_call.1} parent=5 // pred_fallthru
        _
      %p259 = scmp.le.s32.totalorder 1, %s16
      %p260 = scmp.lt.s32.totalorder %s16, 5
      %p261 = pnand %p259, %p260
      %p262 = pneg %p261
      // Predicated region
      $region45: #{tpu_custom_call.1} parent=5 // pred_check
        _
      $region46: #{tpu_custom_call.1} parent=5 // pred_check_branch
        %264 = sbr.rel (%p261) target = $region48
      $region47: #{tpu_custom_call.1} parent=5 // pred_region
        %s265 = ssub.s32 %s16, 1
        %p266 = scmp.lt.s32.totalorder %s21, 3
        %s267 = scalar_select %p266, %s21, 3
        %s268 = smul.addr %s267, 16
        %s269 = smul.addr %s268, 4
        %s270 = scalar_lea.vmem %s0, %s269
        %p271 = pneg %p42
        %p272 = pneg %p39
        %p273 = scmp.lt.s32.totalorder %s21, 3
        %s274 = scalar_select %p273, %s21, 3
        %s275 = smul.addr %s274, 16
        %s276 = smul.addr %s275, 4
        %s277 = scalar_lea.vmem %s1, %s276
        %p278 = pneg %p68
        %p279 = pneg %p65
        %p280 = scmp.lt.s32.totalorder %s21, 3
        %s281 = scalar_select %p280, %s21, 3
        %s282 = smul.addr %s281, 16
        %s283 = smul.addr %s282, 8
        %s284 = scalar_lea.vmem %s2, %s283
        %p285 = pneg %p94
        %p286 = pneg %p91
        %p287 = pneg %p115
        %p288 = pneg %p112
        %p289 = pneg %p136
        %p290 = pneg %p133
        %p291 = pneg %p157
        %p292 = pneg %p154
        %p293 = pneg %p178
        %p294 = pneg %p175
        %p295 = pneg %p204
        %p296 = pneg %p201
        %s297 = sand.u32 %s191, 1
        %s298 = scalar_lea.sflag [#allocation3], %s297
        %s299 = sand.u32 %s191, 1
        %s300 = smul.addr %s299, 128
        %s301 = scalar_lea.vmem [#allocation2], %s300
        %p302 = scmp.lt.s32.totalorder %s21, 3
        %s303 = scalar_select %p302, %s21, 3
        %s304 = smul.addr %s303, 16
        %s305 = smul.addr %s304, 4
        %s306 = scalar_lea.vmem %s0, %s305
        %p307 = scmp.lt.s32.totalorder %s21, 3
        %s308 = scalar_select %p307, %s21, 3
        %s309 = smul.addr %s308, 16
        %s310 = smul.addr %s309, 4
        %s311 = scalar_lea.vmem %s1, %s310
        %p312 = scmp.lt.s32.totalorder %s21, 3
        %s313 = scalar_select %p312, %s21, 3
        %s314 = smul.addr %s313, 16
        %s315 = smul.addr %s314, 8
        %s316 = scalar_lea.vmem %s2, %s315
        %v318 = vld [vmem:[%s306] sm:$0xf]
        %v319 = vld [vmem:[%s306 + $0x4] sm:$0xf]
        %v320 = vld [vmem:[%s306 + $0x8] sm:$0xf]
        %v321 = vld [vmem:[%s306 + $0xc] sm:$0xf]
        %v322 = vld [vmem:[%s306 + $0x10] sm:$0xf]
        %v323 = vld [vmem:[%s306 + $0x14] sm:$0xf]
        %v324 = vld [vmem:[%s306 + $0x18] sm:$0xf]
        %v325 = vld [vmem:[%s306 + $0x1c] sm:$0xf]
        %v326 = vld [vmem:[%s306 + $0x20] sm:$0xf]
        %v327 = vld [vmem:[%s306 + $0x24] sm:$0xf]
        %v328 = vld [vmem:[%s306 + $0x28] sm:$0xf]
        %v329 = vld [vmem:[%s306 + $0x2c] sm:$0xf]
        %v330 = vld [vmem:[%s306 + $0x30] sm:$0xf]
        %v331 = vld [vmem:[%s306 + $0x34] sm:$0xf]
        %v332 = vld [vmem:[%s306 + $0x38] sm:$0xf]
        %v333 = vld [vmem:[%s306 + $0x3c] sm:$0xf]
        %v334 = vunpack.c.l.bf16 %v318
        %v335 = vunpack.c.l.bf16 %v319
        %v336 = vunpack.c.l.bf16 %v320
        %v337 = vunpack.c.l.bf16 %v321
        %v338 = vunpack.c.l.bf16 %v322
        %v339 = vunpack.c.l.bf16 %v323
        %v340 = vunpack.c.l.bf16 %v324
        %v341 = vunpack.c.l.bf16 %v325
        %v342 = vunpack.c.l.bf16 %v326
        %v343 = vunpack.c.l.bf16 %v327
        %v344 = vunpack.c.l.bf16 %v328
        %v345 = vunpack.c.l.bf16 %v329
        %v346 = vunpack.c.l.bf16 %v330
        %v347 = vunpack.c.l.bf16 %v331
        %v348 = vunpack.c.l.bf16 %v332
        %v349 = vunpack.c.l.bf16 %v333
        %350 = vadd.xlane.f32.xlu0 %v334
        %v351 = vpop.xlane.xlu0 %350
        %352 = vadd.xlane.f32.xlu0 %v335
        %v353 = vpop.xlane.xlu0 %352
        %354 = vadd.xlane.f32.xlu0 %v336
        %v355 = vpop.xlane.xlu0 %354
        %356 = vadd.xlane.f32.xlu0 %v337
        %v357 = vpop.xlane.xlu0 %356
        %358 = vadd.xlane.f32.xlu0 %v338
        %v359 = vpop.xlane.xlu0 %358
        %360 = vadd.xlane.f32.xlu0 %v339
        %v361 = vpop.xlane.xlu0 %360
        %362 = vadd.xlane.f32.xlu0 %v340
        %v363 = vpop.xlane.xlu0 %362
        %364 = vadd.xlane.f32.xlu0 %v341
        %v365 = vpop.xlane.xlu0 %364
        %366 = vadd.xlane.f32.xlu0 %v342
        %v367 = vpop.xlane.xlu0 %366
        %368 = vadd.xlane.f32.xlu0 %v343
        %v369 = vpop.xlane.xlu0 %368
        %370 = vadd.xlane.f32.xlu0 %v344
        %v371 = vpop.xlane.xlu0 %370
        %372 = vadd.xlane.f32.xlu0 %v345
        %v373 = vpop.xlane.xlu0 %372
        %374 = vadd.xlane.f32.xlu0 %v346
        %v375 = vpop.xlane.xlu0 %374
        %376 = vadd.xlane.f32.xlu0 %v347
        %v377 = vpop.xlane.xlu0 %376
        %378 = vadd.xlane.f32.xlu0 %v348
        %v379 = vpop.xlane.xlu0 %378
        %380 = vadd.xlane.f32.xlu0 %v349
        %v381 = vpop.xlane.xlu0 %380
        %v382 = vadd.f32 %v351, 1.0
        %v383 = vadd.f32 %v353, 1.0
        %v384 = vadd.f32 %v355, 1.0
        %v385 = vadd.f32 %v357, 1.0
        %v386 = vadd.f32 %v359, 1.0
        %v387 = vadd.f32 %v361, 1.0
        %v388 = vadd.f32 %v363, 1.0
        %v389 = vadd.f32 %v365, 1.0
        %v390 = vadd.f32 %v367, 1.0
        %v391 = vadd.f32 %v369, 1.0
        %v392 = vadd.f32 %v371, 1.0
        %v393 = vadd.f32 %v373, 1.0
        %v394 = vadd.f32 %v375, 1.0
        %v395 = vadd.f32 %v377, 1.0
        %v396 = vadd.f32 %v379, 1.0
        %v397 = vadd.f32 %v381, 1.0
        %v398 = vrsqrt.pop %v382
        %v399 = vrsqrt.pop %v383
        %v400 = vrsqrt.pop %v384
        %v401 = vrsqrt.pop %v385
        %v402 = vrsqrt.pop %v386
        %v403 = vrsqrt.pop %v387
        %v404 = vrsqrt.pop %v388
        %v405 = vrsqrt.pop %v389
        %v406 = vrsqrt.pop %v390
        %v407 = vrsqrt.pop %v391
        %v408 = vrsqrt.pop %v392
        %v409 = vrsqrt.pop %v393
        %v410 = vrsqrt.pop %v394
        %v411 = vrsqrt.pop %v395
        %v412 = vrsqrt.pop %v396
        %v413 = vrsqrt.pop %v397
        %v414 = vld [vmem:[%s316] sm:$0xff]
        %v415 = vld [vmem:[%s316 + $0x8] sm:$0xff]
        %v416 = vld [vmem:[%s316 + $0x10] sm:$0xff]
        %v417 = vld [vmem:[%s316 + $0x18] sm:$0xff]
        %v418 = vld [vmem:[%s316 + $0x20] sm:$0xff]
        %v419 = vld [vmem:[%s316 + $0x28] sm:$0xff]
        %v420 = vld [vmem:[%s316 + $0x30] sm:$0xff]
        %v421 = vld [vmem:[%s316 + $0x38] sm:$0xff]
        %v422 = vld [vmem:[%s316 + $0x40] sm:$0xff]
        %v423 = vld [vmem:[%s316 + $0x48] sm:$0xff]
        %v424 = vld [vmem:[%s316 + $0x50] sm:$0xff]
        %v425 = vld [vmem:[%s316 + $0x58] sm:$0xff]
        %v426 = vld [vmem:[%s316 + $0x60] sm:$0xff]
        %v427 = vld [vmem:[%s316 + $0x68] sm:$0xff]
        %v428 = vld [vmem:[%s316 + $0x70] sm:$0xff]
        %v429 = vld [vmem:[%s316 + $0x78] sm:$0xff]
        %v430 = vld [vmem:[%s3] sm:$0xff]
        %v431 = vld [vmem:[%s3 + $0x8] sm:$0xff]
        %v432 = vld [vmem:[%s3 + $0x10] sm:$0xff]
        %v433 = vld [vmem:[%s3 + $0x18] sm:$0xff]
        %v434 = vpack.c.bf16 %v431, %v430
        %v435 = vpack.c.bf16 %v433, %v432
        %v436 = vmul.f32 %v398, %v414
        %v437 = vmul.f32 %v399, %v415
        %v438 = vmul.f32 %v400, %v416
        %v439 = vmul.f32 %v401, %v417
        %v440 = vmul.f32 %v402, %v418
        %v441 = vmul.f32 %v403, %v419
        %v442 = vmul.f32 %v404, %v420
        %v443 = vmul.f32 %v405, %v421
        %v444 = vmul.f32 %v406, %v422
        %v445 = vmul.f32 %v407, %v423
        %v446 = vmul.f32 %v408, %v424
        %v447 = vmul.f32 %v409, %v425
        %v448 = vmul.f32 %v410, %v426
        %v449 = vmul.f32 %v411, %v427
        %v450 = vmul.f32 %v412, %v428
        %v451 = vmul.f32 %v413, %v429
        %v452 = vpack.c.bf16 %v437, %v436
        %v453 = vpack.c.bf16 %v439, %v438
        %v454 = vpack.c.bf16 %v441, %v440
        %v455 = vpack.c.bf16 %v443, %v442
        %v456 = vpack.c.bf16 %v445, %v444
        %v457 = vpack.c.bf16 %v447, %v446
        %v458 = vpack.c.bf16 %v449, %v448
        %v459 = vpack.c.bf16 %v451, %v450
        %v476 = vunpack.c.l.b16 %v318
        %v477 = vunpack.c.l.b16 %v319
        %v478 = vunpack.c.l.b16 %v320
        %v479 = vunpack.c.l.b16 %v321
        %v480 = vunpack.c.l.b16 %v322
        %v481 = vunpack.c.l.b16 %v323
        %v482 = vunpack.c.l.b16 %v324
        %v483 = vunpack.c.l.b16 %v325
        %v484 = vunpack.c.l.b16 %v326
        %v485 = vunpack.c.l.b16 %v327
        %v486 = vunpack.c.l.b16 %v328
        %v487 = vunpack.c.l.b16 %v329
        %v488 = vunpack.c.l.b16 %v330
        %v489 = vunpack.c.l.b16 %v331
        %v490 = vunpack.c.l.b16 %v332
        %v491 = vunpack.c.l.b16 %v333
        %v492 = vpack.c.b16 %v477, %v476
        %v493 = vpack.c.b16 %v479, %v478
        %v494 = vpack.c.b16 %v481, %v480
        %v495 = vpack.c.b16 %v483, %v482
        %v496 = vpack.c.b16 %v485, %v484
        %v497 = vpack.c.b16 %v487, %v486
        %v498 = vpack.c.b16 %v489, %v488
        %v499 = vpack.c.b16 %v491, %v490
        %508 = vmatprep.subr.bf16.mxu0 0
        %509 = vmatpush1.bf16.msra.mxu0 %v452
        %510 = vmatprep.subr.bf16.mxu0 0
        %511 = vmatpush1.bf16.msra.mxu0 %v453
        %512 = vmatprep.subr.bf16.mxu0 0
        %513 = vmatpush1.bf16.msra.mxu0 %v454
        %514 = vmatprep.subr.bf16.mxu0 0
        %515 = vmatpush1.bf16.msra.mxu0 %v455
        %516 = vmatprep.subr.bf16.mxu0 0
        %517 = vmatpush1.bf16.msra.mxu0 %v456
        %518 = vmatprep.subr.bf16.mxu0 0
        %519 = vmatpush1.bf16.msra.mxu0 %v457
        %520 = vmatprep.subr.bf16.mxu0 0
        %521 = vmatpush1.bf16.msra.mxu0 %v458
        %522 = vmatprep.subr.bf16.mxu0 0
        %523 = vmatpush1.bf16.msra.mxu0 %v459
        %524 = vmatprep.subr.bf16.mxu0 0
        %525 = vmatpush1.bf16.msra.mxu0 0
        %526 = vmatprep.subr.bf16.mxu0 0
        %527 = vmatpush1.bf16.msra.mxu0 0
        %528 = vmatprep.subr.bf16.mxu0 0
        %529 = vmatpush1.bf16.msra.mxu0 0
        %530 = vmatprep.subr.bf16.mxu0 0
        %531 = vmatpush1.bf16.msra.mxu0 0
        %532 = vmatprep.subr.bf16.mxu0 0
        %533 = vmatpush1.bf16.msra.mxu0 0
        %534 = vmatprep.subr.bf16.mxu0 0
        %535 = vmatpush1.bf16.msra.mxu0 0
        %536 = vmatprep.subr.bf16.mxu0 0
        %537 = vmatpush1.bf16.msra.mxu0 0
        %538 = vmatprep.subr.bf16.mxu0 0
        %539 = vmatpush1.bf16.msra.mxu0 0
        %540 = vmatprep.mubr.bf16.mxu0 0
        %541 = vmatmul.mubr.bf16.gmra.mrb[0].mxu0 %v492
        %v542 = vpop.f32.mrb[0].mxu0
        %v543 = vadd.f32 %v436, %v542
        %v544 = vpop.f32.mrb[0].mxu0
        %v545 = vpop.f32.mrb[0].mxu0
        %v546 = vadd.f32 %v437, %v545
        %v547 = vpop.f32.mrb[0].mxu0
        %548 = vmatprep.mubr.bf16.mxu0 0
        %549 = vmatmul.mubr.bf16.gmra.mrb[0].mxu0 %v493
        %v550 = vpop.f32.mrb[0].mxu0
        %v551 = vadd.f32 %v438, %v550
        %v552 = vpop.f32.mrb[0].mxu0
        %v553 = vpop.f32.mrb[0].mxu0
        %v554 = vadd.f32 %v439, %v553
        %v555 = vpop.f32.mrb[0].mxu0
        %556 = vmatprep.mubr.bf16.mxu0 0
        %557 = vmatmul.mubr.bf16.gmra.mrb[0].mxu0 %v494
        %v558 = vpop.f32.mrb[0].mxu0
        %v559 = vadd.f32 %v440, %v558
        %v560 = vpop.f32.mrb[0].mxu0
        %v561 = vpop.f32.mrb[0].mxu0
        %v562 = vadd.f32 %v441, %v561
        %v563 = vpop.f32.mrb[0].mxu0
        %564 = vmatprep.mubr.bf16.mxu0 0
        %565 = vmatmul.mubr.bf16.gmra.mrb[0].mxu0 %v495
        %v566 = vpop.f32.mrb[0].mxu0
        %v567 = vadd.f32 %v442, %v566
        %v568 = vpop.f32.mrb[0].mxu0
        %v569 = vpop.f32.mrb[0].mxu0
        %v570 = vadd.f32 %v443, %v569
        %v571 = vpop.f32.mrb[0].mxu0
        %572 = vmatprep.mubr.bf16.mxu0 0
        %573 = vmatmul.mubr.bf16.gmra.mrb[0].mxu0 %v496
        %v574 = vpop.f32.mrb[0].mxu0
        %v575 = vadd.f32 %v444, %v574
        %v576 = vpop.f32.mrb[0].mxu0
        %v577 = vpop.f32.mrb[0].mxu0
        %v578 = vadd.f32 %v445, %v577
        %v579 = vpop.f32.mrb[0].mxu0
        %580 = vmatprep.mubr.bf16.mxu0 0
        %581 = vmatmul.mubr.bf16.gmra.mrb[0].mxu0 %v497
        %v582 = vpop.f32.mrb[0].mxu0
        %v583 = vadd.f32 %v446, %v582
        %v584 = vpop.f32.mrb[0].mxu0
        %v585 = vpop.f32.mrb[0].mxu0
        %v586 = vadd.f32 %v447, %v585
        %v587 = vpop.f32.mrb[0].mxu0
        %588 = vmatprep.mubr.bf16.mxu0 0
        %589 = vmatmul.mubr.bf16.gmra.mrb[0].mxu0 %v498
        %v590 = vpop.f32.mrb[0].mxu0
        %v591 = vadd.f32 %v448, %v590
        %v592 = vpop.f32.mrb[0].mxu0
        %v593 = vpop.f32.mrb[0].mxu0
        %v594 = vadd.f32 %v449, %v593
        %v595 = vpop.f32.mrb[0].mxu0
        %596 = vmatprep.mubr.bf16.mxu0 0
        %597 = vmatmul.mubr.bf16.gmra.mrb[0].mxu0 %v499
        %v598 = vpop.f32.mrb[0].mxu0
        %v599 = vadd.f32 %v450, %v598
        %v600 = vpop.f32.mrb[0].mxu0
        %v601 = vpop.f32.mrb[0].mxu0
        %v602 = vadd.f32 %v451, %v601
        %v603 = vpop.f32.mrb[0].mxu0
        %604 = vdwg.mxu0
        %v605 = vmul.f32 %v398, %v543
        %v606 = vmul.f32 %v399, %v546
        %v607 = vmul.f32 %v400, %v551
        %v608 = vmul.f32 %v401, %v554
        %v609 = vmul.f32 %v402, %v559
        %v610 = vmul.f32 %v403, %v562
        %v611 = vmul.f32 %v404, %v567
        %v612 = vmul.f32 %v405, %v570
        %v613 = vmul.f32 %v406, %v575
        %v614 = vmul.f32 %v407, %v578
        %v615 = vmul.f32 %v408, %v583
        %v616 = vmul.f32 %v409, %v586
        %v617 = vmul.f32 %v410, %v591
        %v618 = vmul.f32 %v411, %v594
        %v619 = vmul.f32 %v412, %v599
        %v620 = vmul.f32 %v413, %v602
        %v621 = vpack.c.bf16 %v606, %v605
        %v622 = vpack.c.bf16 %v608, %v607
        %v623 = vpack.c.bf16 %v610, %v609
        %v624 = vpack.c.bf16 %v612, %v611
        %v625 = vpack.c.bf16 %v614, %v613
        %v626 = vpack.c.bf16 %v616, %v615
        %v627 = vpack.c.bf16 %v618, %v617
        %v628 = vpack.c.bf16 %v620, %v619
        %v629 = vld [vmem:[%s4] sm:$0x1]
        %v631 = vlaneseq
        %v632 = vshrl.u32 %v631, 7
        %v633 = vsub.s32 0, %v632
        %v634 = vrot.slane %v629, %v633
        %vm636 = vcmask 261120
        %v638 = vsel %vm636, %v621, 0
        %v641 = vsel %vm636, %v622, 0
        %v644 = vsel %vm636, %v623, 0
        %v647 = vsel %vm636, %v624, 0
        %v650 = vsel %vm636, %v625, 0
        %v653 = vsel %vm636, %v626, 0
        %v656 = vsel %vm636, %v627, 0
        %v659 = vsel %vm636, %v628, 0
        %661 = vmatprep.subr.bf16.mxu0 0
        %662 = vmatpush1.bf16.msra.mxu0 %v434
        %663 = vmatprep.subr.bf16.mxu0 0
        %664 = vmatpush1.bf16.msra.mxu0 %v435
        %665 = vmatprep.subr.bf16.mxu0 0
        %666 = vmatpush1.bf16.msra.mxu0 0
        %667 = vmatprep.subr.bf16.mxu0 0
        %668 = vmatpush1.bf16.msra.mxu0 0
        %669 = vmatprep.subr.bf16.mxu0 0
        %670 = vmatpush1.bf16.msra.mxu0 0
        %671 = vmatprep.subr.bf16.mxu0 0
        %672 = vmatpush1.bf16.msra.mxu0 0
        %673 = vmatprep.subr.bf16.mxu0 0
        %674 = vmatpush1.bf16.msra.mxu0 0
        %675 = vmatprep.subr.bf16.mxu0 0
        %676 = vmatpush1.bf16.msra.mxu0 0
        %677 = vmatprep.subr.bf16.mxu0 0
        %678 = vmatpush1.bf16.msra.mxu0 0
        %679 = vmatprep.subr.bf16.mxu0 0
        %680 = vmatpush1.bf16.msra.mxu0 0
        %681 = vmatprep.subr.bf16.mxu0 0
        %682 = vmatpush1.bf16.msra.mxu0 0
        %683 = vmatprep.subr.bf16.mxu0 0
        %684 = vmatpush1.bf16.msra.mxu0 0
        %685 = vmatprep.subr.bf16.mxu0 0
        %686 = vmatpush1.bf16.msra.mxu0 0
        %687 = vmatprep.subr.bf16.mxu0 0
        %688 = vmatpush1.bf16.msra.mxu0 0
        %689 = vmatprep.subr.bf16.mxu0 0
        %690 = vmatpush1.bf16.msra.mxu0 0
        %691 = vmatprep.subr.bf16.mxu0 0
        %692 = vmatpush1.bf16.msra.mxu0 0
        %693 = vmatprep.mubr.bf16.mxu0 0
        %694 = vmatmul.mubr.bf16.gmra.mrb[0].mxu0 %v638
        %v695 = vpop.f32.mrb[0].mxu0
        %v696 = vadd.f32 %v634, %v695
        %v697 = vpop.f32.mrb[0].mxu0
        %v698 = vpop.f32.mrb[0].mxu0
        %v699 = vadd.f32 %v634, %v698
        %v700 = vpop.f32.mrb[0].mxu0
        %701 = vmatprep.mubr.bf16.mxu0 0
        %702 = vmatmul.mubr.bf16.gmra.mrb[0].mxu0 %v641
        %v703 = vpop.f32.mrb[0].mxu0
        %v704 = vadd.f32 %v634, %v703
        %v705 = vpop.f32.mrb[0].mxu0
        %v706 = vpop.f32.mrb[0].mxu0
        %v707 = vadd.f32 %v634, %v706
        %v708 = vpop.f32.mrb[0].mxu0
        %709 = vmatprep.mubr.bf16.mxu0 0
        %710 = vmatmul.mubr.bf16.gmra.mrb[0].mxu0 %v644
        %v711 = vpop.f32.mrb[0].mxu0
        %v712 = vadd.f32 %v634, %v711
        %v713 = vpop.f32.mrb[0].mxu0
        %v714 = vpop.f32.mrb[0].mxu0
        %v715 = vadd.f32 %v634, %v714
        %v716 = vpop.f32.mrb[0].mxu0
        %717 = vmatprep.mubr.bf16.mxu0 0
        %718 = vmatmul.mubr.bf16.gmra.mrb[0].mxu0 %v647
        %v719 = vpop.f32.mrb[0].mxu0
        %v720 = vadd.f32 %v634, %v719
        %v721 = vpop.f32.mrb[0].mxu0
        %v722 = vpop.f32.mrb[0].mxu0
        %v723 = vadd.f32 %v634, %v722
        %v724 = vpop.f32.mrb[0].mxu0
        %725 = vmatprep.mubr.bf16.mxu0 0
        %726 = vmatmul.mubr.bf16.gmra.mrb[0].mxu0 %v650
        %v727 = vpop.f32.mrb[0].mxu0
        %v728 = vadd.f32 %v634, %v727
        %v729 = vpop.f32.mrb[0].mxu0
        %v730 = vpop.f32.mrb[0].mxu0
        %v731 = vadd.f32 %v634, %v730
        %v732 = vpop.f32.mrb[0].mxu0
        %733 = vmatprep.mubr.bf16.mxu0 0
        %734 = vmatmul.mubr.bf16.gmra.mrb[0].mxu0 %v653
        %v735 = vpop.f32.mrb[0].mxu0
        %v736 = vadd.f32 %v634, %v735
        %v737 = vpop.f32.mrb[0].mxu0
        %v738 = vpop.f32.mrb[0].mxu0
        %v739 = vadd.f32 %v634, %v738
        %v740 = vpop.f32.mrb[0].mxu0
        %741 = vmatprep.mubr.bf16.mxu0 0
        %742 = vmatmul.mubr.bf16.gmra.mrb[0].mxu0 %v656
        %v743 = vpop.f32.mrb[0].mxu0
        %v744 = vadd.f32 %v634, %v743
        %v745 = vpop.f32.mrb[0].mxu0
        %v746 = vpop.f32.mrb[0].mxu0
        %v747 = vadd.f32 %v634, %v746
        %v748 = vpop.f32.mrb[0].mxu0
        %749 = vmatprep.mubr.bf16.mxu0 0
        %750 = vmatmul.mubr.bf16.gmra.mrb[0].mxu0 %v659
        %v751 = vpop.f32.mrb[0].mxu0
        %v752 = vadd.f32 %v634, %v751
        %v753 = vpop.f32.mrb[0].mxu0
        %v754 = vpop.f32.mrb[0].mxu0
        %v755 = vadd.f32 %v634, %v754
        %v756 = vpop.f32.mrb[0].mxu0
        %757 = vdwg.mxu0
        %v758 = vmax.f32 %v696, 0.0
        %v759 = vmax.f32 %v699, 0.0
        %v760 = vmax.f32 %v704, 0.0
        %v761 = vmax.f32 %v707, 0.0
        %v762 = vmax.f32 %v712, 0.0
        %v763 = vmax.f32 %v715, 0.0
        %v764 = vmax.f32 %v720, 0.0
        %v765 = vmax.f32 %v723, 0.0
        %v766 = vmax.f32 %v728, 0.0
        %v767 = vmax.f32 %v731, 0.0
        %v768 = vmax.f32 %v736, 0.0
        %v769 = vmax.f32 %v739, 0.0
        %v770 = vmax.f32 %v744, 0.0
        %v771 = vmax.f32 %v747, 0.0
        %v772 = vmax.f32 %v752, 0.0
        %v773 = vmax.f32 %v755, 0.0
        %v774 = vld [vmem:[%s311] sm:$0xf]
        %v775 = vld [vmem:[%s311 + $0x4] sm:$0xf]
        %v776 = vld [vmem:[%s311 + $0x8] sm:$0xf]
        %v777 = vld [vmem:[%s311 + $0xc] sm:$0xf]
        %v778 = vld [vmem:[%s311 + $0x10] sm:$0xf]
        %v779 = vld [vmem:[%s311 + $0x14] sm:$0xf]
        %v780 = vld [vmem:[%s311 + $0x18] sm:$0xf]
        %v781 = vld [vmem:[%s311 + $0x1c] sm:$0xf]
        %v782 = vld [vmem:[%s311 + $0x20] sm:$0xf]
        %v783 = vld [vmem:[%s311 + $0x24] sm:$0xf]
        %v784 = vld [vmem:[%s311 + $0x28] sm:$0xf]
        %v785 = vld [vmem:[%s311 + $0x2c] sm:$0xf]
        %v786 = vld [vmem:[%s311 + $0x30] sm:$0xf]
        %v787 = vld [vmem:[%s311 + $0x34] sm:$0xf]
        %v788 = vld [vmem:[%s311 + $0x38] sm:$0xf]
        %v789 = vld [vmem:[%s311 + $0x3c] sm:$0xf]
        %v790 = vunpack.c.l.bf16 %v774
        %v791 = vunpack.c.l.bf16 %v775
        %v792 = vunpack.c.l.bf16 %v776
        %v793 = vunpack.c.l.bf16 %v777
        %v794 = vunpack.c.l.bf16 %v778
        %v795 = vunpack.c.l.bf16 %v779
        %v796 = vunpack.c.l.bf16 %v780
        %v797 = vunpack.c.l.bf16 %v781
        %v798 = vunpack.c.l.bf16 %v782
        %v799 = vunpack.c.l.bf16 %v783
        %v800 = vunpack.c.l.bf16 %v784
        %v801 = vunpack.c.l.bf16 %v785
        %v802 = vunpack.c.l.bf16 %v786
        %v803 = vunpack.c.l.bf16 %v787
        %v804 = vunpack.c.l.bf16 %v788
        %v805 = vunpack.c.l.bf16 %v789
        %806 = vadd.xlane.f32.xlu0 %v790
        %v807 = vpop.xlane.xlu0 %806
        %808 = vadd.xlane.f32.xlu0 %v791
        %v809 = vpop.xlane.xlu0 %808
        %810 = vadd.xlane.f32.xlu0 %v792
        %v811 = vpop.xlane.xlu0 %810
        %812 = vadd.xlane.f32.xlu0 %v793
        %v813 = vpop.xlane.xlu0 %812
        %814 = vadd.xlane.f32.xlu0 %v794
        %v815 = vpop.xlane.xlu0 %814
        %816 = vadd.xlane.f32.xlu0 %v795
        %v817 = vpop.xlane.xlu0 %816
        %818 = vadd.xlane.f32.xlu0 %v796
        %v819 = vpop.xlane.xlu0 %818
        %820 = vadd.xlane.f32.xlu0 %v797
        %v821 = vpop.xlane.xlu0 %820
        %822 = vadd.xlane.f32.xlu0 %v798
        %v823 = vpop.xlane.xlu0 %822
        %824 = vadd.xlane.f32.xlu0 %v799
        %v825 = vpop.xlane.xlu0 %824
        %826 = vadd.xlane.f32.xlu0 %v800
        %v827 = vpop.xlane.xlu0 %826
        %828 = vadd.xlane.f32.xlu0 %v801
        %v829 = vpop.xlane.xlu0 %828
        %830 = vadd.xlane.f32.xlu0 %v802
        %v831 = vpop.xlane.xlu0 %830
        %832 = vadd.xlane.f32.xlu0 %v803
        %v833 = vpop.xlane.xlu0 %832
        %834 = vadd.xlane.f32.xlu0 %v804
        %v835 = vpop.xlane.xlu0 %834
        %836 = vadd.xlane.f32.xlu0 %v805
        %v837 = vpop.xlane.xlu0 %836
        %v838 = vadd.f32 %v807, 1.0
        %v839 = vadd.f32 %v809, 1.0
        %v840 = vadd.f32 %v811, 1.0
        %v841 = vadd.f32 %v813, 1.0
        %v842 = vadd.f32 %v815, 1.0
        %v843 = vadd.f32 %v817, 1.0
        %v844 = vadd.f32 %v819, 1.0
        %v845 = vadd.f32 %v821, 1.0
        %v846 = vadd.f32 %v823, 1.0
        %v847 = vadd.f32 %v825, 1.0
        %v848 = vadd.f32 %v827, 1.0
        %v849 = vadd.f32 %v829, 1.0
        %v850 = vadd.f32 %v831, 1.0
        %v851 = vadd.f32 %v833, 1.0
        %v852 = vadd.f32 %v835, 1.0
        %v853 = vadd.f32 %v837, 1.0
        %v854 = vrsqrt.pop %v838
        %v855 = vrsqrt.pop %v839
        %v856 = vrsqrt.pop %v840
        %v857 = vrsqrt.pop %v841
        %v858 = vrsqrt.pop %v842
        %v859 = vrsqrt.pop %v843
        %v860 = vrsqrt.pop %v844
        %v861 = vrsqrt.pop %v845
        %v862 = vrsqrt.pop %v846
        %v863 = vrsqrt.pop %v847
        %v864 = vrsqrt.pop %v848
        %v865 = vrsqrt.pop %v849
        %v866 = vrsqrt.pop %v850
        %v867 = vrsqrt.pop %v851
        %v868 = vrsqrt.pop %v852
        %v869 = vrsqrt.pop %v853
        %v870 = vld [vmem:[%s5] sm:$0xff]
        %v871 = vld [vmem:[%s5 + $0x8] sm:$0xff]
        %v872 = vld [vmem:[%s5 + $0x10] sm:$0xff]
        %v873 = vld [vmem:[%s5 + $0x18] sm:$0xff]
        %v874 = vld [vmem:[%s5 + $0x20] sm:$0xff]
        %v875 = vld [vmem:[%s5 + $0x28] sm:$0xff]
        %v876 = vld [vmem:[%s5 + $0x30] sm:$0xff]
        %v877 = vld [vmem:[%s5 + $0x38] sm:$0xff]
        %v878 = vpack.c.bf16 %v871, %v870
        %v879 = vpack.c.bf16 %v873, %v872
        %v880 = vpack.c.bf16 %v875, %v874
        %v881 = vpack.c.bf16 %v877, %v876
        %v882 = vpack.c.bf16 %v759, %v758
        %v883 = vpack.c.bf16 %v761, %v760
        %v884 = vpack.c.bf16 %v763, %v762
        %v885 = vpack.c.bf16 %v765, %v764
        %v886 = vpack.c.bf16 %v767, %v766
        %v887 = vpack.c.bf16 %v769, %v768
        %v888 = vpack.c.bf16 %v771, %v770
        %v889 = vpack.c.bf16 %v773, %v772
        %vm890 = vcmask 523264
        %v892 = vsel %vm890, %v882, 0
        %v895 = vsel %vm890, %v883, 0
        %v898 = vsel %vm890, %v884, 0
        %v901 = vsel %vm890, %v885, 0
        %v904 = vsel %vm890, %v886, 0
        %v907 = vsel %vm890, %v887, 0
        %v910 = vsel %vm890, %v888, 0
        %v913 = vsel %vm890, %v889, 0
        %915 = vmatprep.subr.bf16.mxu0 0
        %916 = vmatpush1.bf16.msra.mxu0 %v878
        %917 = vmatprep.subr.bf16.mxu0 0
        %918 = vmatpush1.bf16.msra.mxu0 %v879
        %919 = vmatprep.subr.bf16.mxu0 0
        %920 = vmatpush1.bf16.msra.mxu0 %v880
        %921 = vmatprep.subr.bf16.mxu0 0
        %922 = vmatpush1.bf16.msra.mxu0 %v881
        %923 = vmatprep.subr.bf16.mxu0 0
        %924 = vmatpush1.bf16.msra.mxu0 0
        %925 = vmatprep.subr.bf16.mxu0 0
        %926 = vmatpush1.bf16.msra.mxu0 0
        %927 = vmatprep.subr.bf16.mxu0 0
        %928 = vmatpush1.bf16.msra.mxu0 0
        %929 = vmatprep.subr.bf16.mxu0 0
        %930 = vmatpush1.bf16.msra.mxu0 0
        %931 = vmatprep.subr.bf16.mxu0 0
        %932 = vmatpush1.bf16.msra.mxu0 0
        %933 = vmatprep.subr.bf16.mxu0 0
        %934 = vmatpush1.bf16.msra.mxu0 0
        %935 = vmatprep.subr.bf16.mxu0 0
        %936 = vmatpush1.bf16.msra.mxu0 0
        %937 = vmatprep.subr.bf16.mxu0 0
        %938 = vmatpush1.bf16.msra.mxu0 0
        %939 = vmatprep.subr.bf16.mxu0 0
        %940 = vmatpush1.bf16.msra.mxu0 0
        %941 = vmatprep.subr.bf16.mxu0 0
        %942 = vmatpush1.bf16.msra.mxu0 0
        %943 = vmatprep.subr.bf16.mxu0 0
        %944 = vmatpush1.bf16.msra.mxu0 0
        %945 = vmatprep.subr.bf16.mxu0 0
        %946 = vmatpush1.bf16.msra.mxu0 0
        %947 = vmatprep.mubr.bf16.mxu0 0
        %948 = vmatmul.mubr.bf16.gmra.mrb[0].mxu0 %v892
        %v949 = vpop.f32.mrb[0].mxu0
        %v950 = vadd.f32 0.0, %v949
        %v951 = vpop.f32.mrb[0].mxu0
        %v952 = vpop.f32.mrb[0].mxu0
        %v953 = vadd.f32 0.0, %v952
        %v954 = vpop.f32.mrb[0].mxu0
        %955 = vmatprep.mubr.bf16.mxu0 0
        %956 = vmatmul.mubr.bf16.gmra.mrb[0].mxu0 %v895
        %v957 = vpop.f32.mrb[0].mxu0
        %v958 = vadd.f32 0.0, %v957
        %v959 = vpop.f32.mrb[0].mxu0
        %v960 = vpop.f32.mrb[0].mxu0
        %v961 = vadd.f32 0.0, %v960
        %v962 = vpop.f32.mrb[0].mxu0
        %963 = vmatprep.mubr.bf16.mxu0 0
        %964 = vmatmul.mubr.bf16.gmra.mrb[0].mxu0 %v898
        %v965 = vpop.f32.mrb[0].mxu0
        %v966 = vadd.f32 0.0, %v965
        %v967 = vpop.f32.mrb[0].mxu0
        %v968 = vpop.f32.mrb[0].mxu0
        %v969 = vadd.f32 0.0, %v968
        %v970 = vpop.f32.mrb[0].mxu0
        %971 = vmatprep.mubr.bf16.mxu0 0
        %972 = vmatmul.mubr.bf16.gmra.mrb[0].mxu0 %v901
        %v973 = vpop.f32.mrb[0].mxu0
        %v974 = vadd.f32 0.0, %v973
        %v975 = vpop.f32.mrb[0].mxu0
        %v976 = vpop.f32.mrb[0].mxu0
        %v977 = vadd.f32 0.0, %v976
        %v978 = vpop.f32.mrb[0].mxu0
        %979 = vmatprep.mubr.bf16.mxu0 0
        %980 = vmatmul.mubr.bf16.gmra.mrb[0].mxu0 %v904
        %v981 = vpop.f32.mrb[0].mxu0
        %v982 = vadd.f32 0.0, %v981
        %v983 = vpop.f32.mrb[0].mxu0
        %v984 = vpop.f32.mrb[0].mxu0
        %v985 = vadd.f32 0.0, %v984
        %v986 = vpop.f32.mrb[0].mxu0
        %987 = vmatprep.mubr.bf16.mxu0 0
        %988 = vmatmul.mubr.bf16.gmra.mrb[0].mxu0 %v907
        %v989 = vpop.f32.mrb[0].mxu0
        %v990 = vadd.f32 0.0, %v989
        %v991 = vpop.f32.mrb[0].mxu0
        %v992 = vpop.f32.mrb[0].mxu0
        %v993 = vadd.f32 0.0, %v992
        %v994 = vpop.f32.mrb[0].mxu0
        %995 = vmatprep.mubr.bf16.mxu0 0
        %996 = vmatmul.mubr.bf16.gmra.mrb[0].mxu0 %v910
        %v997 = vpop.f32.mrb[0].mxu0
        %v998 = vadd.f32 0.0, %v997
        %v999 = vpop.f32.mrb[0].mxu0
        %v1000 = vpop.f32.mrb[0].mxu0
        %v1001 = vadd.f32 0.0, %v1000
        %v1002 = vpop.f32.mrb[0].mxu0
        %1003 = vmatprep.mubr.bf16.mxu0 0
        %1004 = vmatmul.mubr.bf16.gmra.mrb[0].mxu0 %v913
        %v1005 = vpop.f32.mrb[0].mxu0
        %v1006 = vadd.f32 0.0, %v1005
        %v1007 = vpop.f32.mrb[0].mxu0
        %v1008 = vpop.f32.mrb[0].mxu0
        %v1009 = vadd.f32 0.0, %v1008
        %v1010 = vpop.f32.mrb[0].mxu0
        %1011 = vdwg.mxu0
        %v1012 = vmul.f32 %v854, %v950
        %v1013 = vmul.f32 %v855, %v953
        %v1014 = vmul.f32 %v856, %v958
        %v1015 = vmul.f32 %v857, %v961
        %v1016 = vmul.f32 %v858, %v966
        %v1017 = vmul.f32 %v859, %v969
        %v1018 = vmul.f32 %v860, %v974
        %v1019 = vmul.f32 %v861, %v977
        %v1020 = vmul.f32 %v862, %v982
        %v1021 = vmul.f32 %v863, %v985
        %v1022 = vmul.f32 %v864, %v990
        %v1023 = vmul.f32 %v865, %v993
        %v1024 = vmul.f32 %v866, %v998
        %v1025 = vmul.f32 %v867, %v1001
        %v1026 = vmul.f32 %v868, %v1006
        %v1027 = vmul.f32 %v869, %v1009
        %v1028 = vpack.c.bf16 %v1013, %v1012
        %v1029 = vpack.c.bf16 %v1015, %v1014
        %v1030 = vpack.c.bf16 %v1017, %v1016
        %v1031 = vpack.c.bf16 %v1019, %v1018
        %v1032 = vpack.c.bf16 %v1021, %v1020
        %v1033 = vpack.c.bf16 %v1023, %v1022
        %v1034 = vpack.c.bf16 %v1025, %v1024
        %v1035 = vpack.c.bf16 %v1027, %v1026
        %v1052 = vunpack.c.l.b16 %v774
        %v1053 = vunpack.c.l.b16 %v775
        %v1054 = vunpack.c.l.b16 %v776
        %v1055 = vunpack.c.l.b16 %v777
        %v1056 = vunpack.c.l.b16 %v778
        %v1057 = vunpack.c.l.b16 %v779
        %v1058 = vunpack.c.l.b16 %v780
        %v1059 = vunpack.c.l.b16 %v781
        %v1060 = vunpack.c.l.b16 %v782
        %v1061 = vunpack.c.l.b16 %v783
        %v1062 = vunpack.c.l.b16 %v784
        %v1063 = vunpack.c.l.b16 %v785
        %v1064 = vunpack.c.l.b16 %v786
        %v1065 = vunpack.c.l.b16 %v787
        %v1066 = vunpack.c.l.b16 %v788
        %v1067 = vunpack.c.l.b16 %v789
        %v1068 = vpack.c.b16 %v1053, %v1052
        %v1069 = vpack.c.b16 %v1055, %v1054
        %v1070 = vpack.c.b16 %v1057, %v1056
        %v1071 = vpack.c.b16 %v1059, %v1058
        %v1072 = vpack.c.b16 %v1061, %v1060
        %v1073 = vpack.c.b16 %v1063, %v1062
        %v1074 = vpack.c.b16 %v1065, %v1064
        %v1075 = vpack.c.b16 %v1067, %v1066
        %1084 = vmatprep.subr.bf16.mxu0 0
        %1085 = vmatpush1.bf16.msra.mxu0 %v1028
        %1086 = vmatprep.subr.bf16.mxu0 0
        %1087 = vmatpush1.bf16.msra.mxu0 %v1029
        %1088 = vmatprep.subr.bf16.mxu0 0
        %1089 = vmatpush1.bf16.msra.mxu0 %v1030
        %1090 = vmatprep.subr.bf16.mxu0 0
        %1091 = vmatpush1.bf16.msra.mxu0 %v1031
        %1092 = vmatprep.subr.bf16.mxu0 0
        %1093 = vmatpush1.bf16.msra.mxu0 %v1032
        %1094 = vmatprep.subr.bf16.mxu0 0
        %1095 = vmatpush1.bf16.msra.mxu0 %v1033
        %1096 = vmatprep.subr.bf16.mxu0 0
        %1097 = vmatpush1.bf16.msra.mxu0 %v1034
        %1098 = vmatprep.subr.bf16.mxu0 0
        %1099 = vmatpush1.bf16.msra.mxu0 %v1035
        %1100 = vmatprep.subr.bf16.mxu0 0
        %1101 = vmatpush1.bf16.msra.mxu0 0
        %1102 = vmatprep.subr.bf16.mxu0 0
        %1103 = vmatpush1.bf16.msra.mxu0 0
        %1104 = vmatprep.subr.bf16.mxu0 0
        %1105 = vmatpush1.bf16.msra.mxu0 0
        %1106 = vmatprep.subr.bf16.mxu0 0
        %1107 = vmatpush1.bf16.msra.mxu0 0
        %1108 = vmatprep.subr.bf16.mxu0 0
        %1109 = vmatpush1.bf16.msra.mxu0 0
        %1110 = vmatprep.subr.bf16.mxu0 0
        %1111 = vmatpush1.bf16.msra.mxu0 0
        %1112 = vmatprep.subr.bf16.mxu0 0
        %1113 = vmatpush1.bf16.msra.mxu0 0
        %1114 = vmatprep.subr.bf16.mxu0 0
        %1115 = vmatpush1.bf16.msra.mxu0 0
        %1116 = vmatprep.mubr.bf16.mxu0 0
        %1117 = vmatmul.mubr.bf16.gmra.mrb[0].mxu0 %v1068
        %v1118 = vpop.f32.mrb[0].mxu0
        %v1119 = vadd.f32 %v1012, %v1118
        %v1120 = vpop.f32.mrb[0].mxu0
        %v1121 = vpop.f32.mrb[0].mxu0
        %v1122 = vadd.f32 %v1013, %v1121
        %v1123 = vpop.f32.mrb[0].mxu0
        %1124 = vmatprep.mubr.bf16.mxu0 0
        %1125 = vmatmul.mubr.bf16.gmra.mrb[0].mxu0 %v1069
        %v1126 = vpop.f32.mrb[0].mxu0
        %v1127 = vadd.f32 %v1014, %v1126
        %v1128 = vpop.f32.mrb[0].mxu0
        %v1129 = vpop.f32.mrb[0].mxu0
        %v1130 = vadd.f32 %v1015, %v1129
        %v1131 = vpop.f32.mrb[0].mxu0
        %1132 = vmatprep.mubr.bf16.mxu0 0
        %1133 = vmatmul.mubr.bf16.gmra.mrb[0].mxu0 %v1070
        %v1134 = vpop.f32.mrb[0].mxu0
        %v1135 = vadd.f32 %v1016, %v1134
        %v1136 = vpop.f32.mrb[0].mxu0
        %v1137 = vpop.f32.mrb[0].mxu0
        %v1138 = vadd.f32 %v1017, %v1137
        %v1139 = vpop.f32.mrb[0].mxu0
        %1140 = vmatprep.mubr.bf16.mxu0 0
        %1141 = vmatmul.mubr.bf16.gmra.mrb[0].mxu0 %v1071
        %v1142 = vpop.f32.mrb[0].mxu0
        %v1143 = vadd.f32 %v1018, %v1142
        %v1144 = vpop.f32.mrb[0].mxu0
        %v1145 = vpop.f32.mrb[0].mxu0
        %v1146 = vadd.f32 %v1019, %v1145
        %v1147 = vpop.f32.mrb[0].mxu0
        %1148 = vmatprep.mubr.bf16.mxu0 0
        %1149 = vmatmul.mubr.bf16.gmra.mrb[0].mxu0 %v1072
        %v1150 = vpop.f32.mrb[0].mxu0
        %v1151 = vadd.f32 %v1020, %v1150
        %v1152 = vpop.f32.mrb[0].mxu0
        %v1153 = vpop.f32.mrb[0].mxu0
        %v1154 = vadd.f32 %v1021, %v1153
        %v1155 = vpop.f32.mrb[0].mxu0
        %1156 = vmatprep.mubr.bf16.mxu0 0
        %1157 = vmatmul.mubr.bf16.gmra.mrb[0].mxu0 %v1073
        %v1158 = vpop.f32.mrb[0].mxu0
        %v1159 = vadd.f32 %v1022, %v1158
        %v1160 = vpop.f32.mrb[0].mxu0
        %v1161 = vpop.f32.mrb[0].mxu0
        %v1162 = vadd.f32 %v1023, %v1161
        %v1163 = vpop.f32.mrb[0].mxu0
        %1164 = vmatprep.mubr.bf16.mxu0 0
        %1165 = vmatmul.mubr.bf16.gmra.mrb[0].mxu0 %v1074
        %v1166 = vpop.f32.mrb[0].mxu0
        %v1167 = vadd.f32 %v1024, %v1166
        %v1168 = vpop.f32.mrb[0].mxu0
        %v1169 = vpop.f32.mrb[0].mxu0
        %v1170 = vadd.f32 %v1025, %v1169
        %v1171 = vpop.f32.mrb[0].mxu0
        %1172 = vmatprep.mubr.bf16.mxu0 0
        %1173 = vmatmul.mubr.bf16.gmra.mrb[0].mxu0 %v1075
        %v1174 = vpop.f32.mrb[0].mxu0
        %v1175 = vadd.f32 %v1026, %v1174
        %v1176 = vpop.f32.mrb[0].mxu0
        %v1177 = vpop.f32.mrb[0].mxu0
        %v1178 = vadd.f32 %v1027, %v1177
        %v1179 = vpop.f32.mrb[0].mxu0
        %1180 = vdwg.mxu0
        %v1181 = vmul.f32 %v854, %v1119
        %v1182 = vmul.f32 %v855, %v1122
        %v1183 = vmul.f32 %v856, %v1127
        %v1184 = vmul.f32 %v857, %v1130
        %v1185 = vmul.f32 %v858, %v1135
        %v1186 = vmul.f32 %v859, %v1138
        %v1187 = vmul.f32 %v860, %v1143
        %v1188 = vmul.f32 %v861, %v1146
        %v1189 = vmul.f32 %v862, %v1151
        %v1190 = vmul.f32 %v863, %v1154
        %v1191 = vmul.f32 %v864, %v1159
        %v1192 = vmul.f32 %v865, %v1162
        %v1193 = vmul.f32 %v866, %v1167
        %v1194 = vmul.f32 %v867, %v1170
        %v1195 = vmul.f32 %v868, %v1175
        %v1196 = vmul.f32 %v869, %v1178
        %v1197 = vld [vmem:[%s6] sm:$0x1]
        %v1199 = vlaneseq
        %v1200 = vshrl.u32 %v1199, 7
        %v1201 = vsub.s32 0, %v1200
        %v1202 = vrot.slane %v1197, %v1201
        %v1204 = vadd.f32 %v1181, %v1202
        %v1205 = vadd.f32 %v1182, %v1202
        %v1206 = vadd.f32 %v1183, %v1202
        %v1207 = vadd.f32 %v1184, %v1202
        %v1208 = vadd.f32 %v1185, %v1202
        %v1209 = vadd.f32 %v1186, %v1202
        %v1210 = vadd.f32 %v1187, %v1202
        %v1211 = vadd.f32 %v1188, %v1202
        %v1212 = vadd.f32 %v1189, %v1202
        %v1213 = vadd.f32 %v1190, %v1202
        %v1214 = vadd.f32 %v1191, %v1202
        %v1215 = vadd.f32 %v1192, %v1202
        %v1216 = vadd.f32 %v1193, %v1202
        %v1217 = vadd.f32 %v1194, %v1202
        %v1218 = vadd.f32 %v1195, %v1202
        %v1219 = vadd.f32 %v1196, %v1202
        %1220 = vst [vmem:[%s301] sm:$0xff] %v1204
        %1221 = vst [vmem:[%s301 + $0x8] sm:$0xff] %v1205
        %1222 = vst [vmem:[%s301 + $0x10] sm:$0xff] %v1206
        %1223 = vst [vmem:[%s301 + $0x18] sm:$0xff] %v1207
        %1224 = vst [vmem:[%s301 + $0x20] sm:$0xff] %v1208
        %1225 = vst [vmem:[%s301 + $0x28] sm:$0xff] %v1209
        %1226 = vst [vmem:[%s301 + $0x30] sm:$0xff] %v1210
        %1227 = vst [vmem:[%s301 + $0x38] sm:$0xff] %v1211
        %1228 = vst [vmem:[%s301 + $0x40] sm:$0xff] %v1212
        %1229 = vst [vmem:[%s301 + $0x48] sm:$0xff] %v1213
        %1230 = vst [vmem:[%s301 + $0x50] sm:$0xff] %v1214
        %1231 = vst [vmem:[%s301 + $0x58] sm:$0xff] %v1215
        %1232 = vst [vmem:[%s301 + $0x60] sm:$0xff] %v1216
        %1233 = vst [vmem:[%s301 + $0x68] sm:$0xff] %v1217
        %1234 = vst [vmem:[%s301 + $0x70] sm:$0xff] %v1218
        %1235 = vst [vmem:[%s301 + $0x78] sm:$0xff] %v1219
        %s1236 = sand.u32 %s191, 1
        %s1237 = scalar_lea.sflag [#allocation3], %s1236
        %s1238 = sand.u32 %s191, 1
        %s1239 = smul.addr %s1238, 128
        %s1240 = scalar_lea.vmem [#allocation2], %s1239
        // Predicated region
        $region49: #{tpu_custom_call.1} parent=47 // pred_check
          %p1241 = pneg %p201
        $region50: #{tpu_custom_call.1} parent=47 // pred_check_branch
          %1243 = sbr.rel (%p1241) target = $region52
        $region51: #{tpu_custom_call.1} parent=47 // pred_region
          %s1245 = ssub.s32 2048, 2048
          %1246 = vsyncadd %s1237, %s1245
          %s1247 = smul.addr %s21, 16
          %s1248 = smul.addr %s1247, 128
          %s1249 = scalar_lea.hbm %s7, %s1248
          %s1250 = sshll.u32 %s1240, 4
          %s1251 = int_to_ptr.vmem [resolvable:$true] %s1250
          %1256 = dma.vmem_to_hbm [thread:$0]  %s1251, 2048, %s1249, %s1237, 128, 128, 8
        $region52: #{tpu_custom_call.1} parent=47 // pred_fallthru
          _
      $region48: #{tpu_custom_call.1} parent=5 // pred_fallthru
        _
      %p1257 = scmp.le.s32.totalorder 2, %s16
      // Predicated region
      $region53: #{tpu_custom_call.1} parent=5 // pred_check
        %p1258 = pneg %p1257
      $region54: #{tpu_custom_call.1} parent=5 // pred_check_branch
        %1260 = sbr.rel (%p1258) target = $region56
      $region55: #{tpu_custom_call.1} parent=5 // pred_region
        %s1261 = ssub.s32 %s16, 2
        // Predicated region
        $region57: #{tpu_custom_call.1} parent=55 // pred_check
          %p1262 = pneg %p207
        $region58: #{tpu_custom_call.1} parent=55 // pred_check_branch
          %1264 = sbr.rel (%p1262) target = $region60
        $region59: #{tpu_custom_call.1} parent=55 // pred_region
          %s1265 = sand.u32 %s192, 1
          %s1266 = scalar_lea.sflag [#allocation3], %s1265
          %s1267 = sand.u32 %s192, 1
          %s1268 = smul.addr %s1267, 128
          %s1269 = scalar_lea.vmem [#allocation2], %s1268
          %1270 = dma.done %s1266, 2048
        $region60: #{tpu_custom_call.1} parent=55 // pred_fallthru
          _
      $region56: #{tpu_custom_call.1} parent=5 // pred_fallthru
        _
    $region6: #{tpu_custom_call.1} parent=1 // loop_footer
      %s20 = sadd.s32 1, %s16
    $region7: #{tpu_custom_call.1} parent=1 // loop_footer_branch
      %15 = sbr.rel target = $region3
    $region8: #{tpu_custom_call.1} parent=1 // loop_exit
      _
    %1271 = vsyncpa [#allocation3], 1
    %s1272 = scalar_lea.sflag [#allocation3], 1
    %1273 = vsyncpa %s1272, 1

</llo_original>
